<compile_context>
chip_gen: v6e
topology: v6e:2x2x1
jax: 0.10.0
libtpu: 0.0.40
codegen_flags: <defaults>
</compile_context>

<pallas_src>
import jax
import jax.numpy as jnp
from jax.experimental import pallas as pl
from jax.experimental.pallas import tpu as pltpu


def _round_up(x, m):
    return (x + m - 1) // m * m


def _tpu_budgets():
    """Return (block_byte_budget, vmem_limit_bytes) for this TPU generation."""
    vmem = None
    try:
        info = pltpu.get_tpu_info()
        vmem = getattr(info, "vmem_capacity_bytes", None)
    except Exception:
        vmem = None
    if vmem is not None and vmem >= 100 * 1024 * 1024:
        # v5e / v6e: 128 MiB physical VMEM -> larger blocks, bigger scoped limit.
        return 4 * 1024 * 1024, 64 * 1024 * 1024
    # v7x (64 MiB per-TC VMEM) or unknown: conservative budgets.
    return 2 * 1024 * 1024, 32 * 1024 * 1024


def _pick_tile(dim, unit, max_tile):
    """Tile size for one axis.

    If the whole axis fits, use the full dim (always a legal block shape and
    avoids any ragged remainder). Otherwise pick a multiple of `unit`
    <= max_tile, preferring one that divides the dim evenly (no masked
    remainder block); with a cdiv grid a non-divisor is still correct.
    """
    if dim <= max_tile:
        return dim
    top = max_tile - max_tile % unit
    min_pref = max(unit, top // 4)
    for t in range(top, min_pref - 1, -unit):
        if dim % t == 0:
            return t
    return top


def _linear1d_kernel(x_ref, gain_ref, bias_ref, out_ref):
    # x_ref/out_ref: (TR, TL) tiles; gain_ref/bias_ref: (TR, 1) per-row params.
    # Broadcast of (TR, 1) against (TR, TL) is a cheap per-sublane lane-splat.
    out_ref[...] = x_ref[...] * gain_ref[...] + bias_ref[...]


def linear1d(x, gain, bias, *, inplace=False):
    """x: (N, C, H, W);  gain, bias: (1, C, 1, 1)  ->  (N, C, H, W)."""
    N, C, H, W = x.shape
    HW = H * W
    R = N * C

    # Compute in x's dtype (matches the all-f32 PyTorch module).
    gain = gain.astype(x.dtype)
    bias = bias.astype(x.dtype)

    # Flatten to a lane-dense 2D slab (contiguous reshape: free bitcast) and
    # pre-tile params to per-row vectors (wrapper cost: a few KB).
    x2 = x.reshape(R, HW)
    g2 = jnp.tile(gain.reshape(1, C), (N, 1)).reshape(R, 1)
    b2 = jnp.tile(bias.reshape(1, C), (N, 1)).reshape(R, 1)

    # Dtype-aware tile units and byte-budgeted block sizes.
    itemsize = jnp.dtype(x.dtype).itemsize
    pack = max(1, 4 // itemsize)          # 1 for f32, 2 for bf16, 4 for int8/fp8
    sub_unit = 8 * pack                   # native packed sublane tile
    lane_unit = 128

    block_bytes, vmem_limit = _tpu_budgets()
    max_rows = 256 * pack                 # constant bytes along the row axis
    max_lanes = max(lane_unit,
                    (block_bytes // (max_rows * itemsize)) // lane_unit * lane_unit)

    TR = _pick_tile(R, sub_unit, max_rows)
    TL = _pick_tile(HW, lane_unit, max_lanes)

    grid_r = pl.cdiv(R, TR)
    grid_l = pl.cdiv(HW, TL)

    # v7x has two TensorCores sharing 3.2 TB/s HBM: make sure the parallel
    # grid has >= 2 blocks when the problem would otherwise be a single block.
    if grid_r * grid_l == 1 and R >= 2 * sub_unit:
        TR = _round_up(pl.cdiv(R, 2), sub_unit)
        grid_r = pl.cdiv(R, TR)

    grid = (grid_r, grid_l)

    out2 = pl.pallas_call(
        _linear1d_kernel,
        out_shape=jax.ShapeDtypeStruct((R, HW), x.dtype),
        grid_spec=pltpu.PrefetchScalarGridSpec(
            num_scalar_prefetch=0,
            grid=grid,
            in_specs=[
                pl.BlockSpec((TR, TL), lambda i, j: (i, j)),
                pl.BlockSpec((TR, 1), lambda i, j: (i, 0)),
                pl.BlockSpec((TR, 1), lambda i, j: (i, 0)),
            ],
            out_specs=pl.BlockSpec((TR, TL), lambda i, j: (i, j)),
        ),
        compiler_params=pltpu.CompilerParams(
            dimension_semantics=("parallel", "parallel"),
            vmem_limit_bytes=vmem_limit,
        ),
        # When x is dead at the call site (and donated at the jit boundary),
        # write the result in place over x to halve peak HBM footprint.
        input_output_aliases=({0: 0} if inplace else {}),
    )(x2, g2, b2)

    return out2.reshape(N, C, H, W)


if __name__ == "__main__":
    key = jax.random.PRNGKey(0)
    N, C, H, W = 2, 4, 16, 16

    x = jax.random.normal(key, (N, C, H, W), dtype=jnp.float32)

    # Deterministic parameters matching nn.Parameter(torch.ones/zeros),
    # perturbed slightly so the affine transform is non-trivial.
    gain = jnp.ones((1, C, 1, 1), dtype=jnp.float32) \
        + 0.1 * jnp.arange(C, dtype=jnp.float32).reshape(1, C, 1, 1)
    bias = jnp.zeros((1, C, 1, 1), dtype=jnp.float32) \
        + 0.01 * jnp.arange(C, dtype=jnp.float32).reshape(1, C, 1, 1)

    y = linear1d(x, gain, bias)
    y = jax.block_until_ready(y)

    # Reference check against plain JAX broadcasting.
    y_ref = x * gain + bias
    assert y.shape == (N, C, H, W)
    assert jnp.allclose(y, y_ref, atol=1e-6), "mismatch vs reference"

    # Also exercise a ragged (non-multiple-of-8/128) shape to cover the
    # pad-free cdiv-grid remainder path.
    N2, C2, H2, W2 = 3, 5, 7, 13
    x2 = jax.random.normal(jax.random.PRNGKey(1), (N2, C2, H2, W2), jnp.float32)
    g2 = 1.0 + 0.1 * jnp.arange(C2, dtype=jnp.float32).reshape(1, C2, 1, 1)
    b2 = 0.01 * jnp.arange(C2, dtype=jnp.float32).reshape(1, C2, 1, 1)
    y2 = jax.block_until_ready(linear1d(x2, g2, b2))
    assert jnp.allclose(y2, x2 * g2 + b2, atol=1e-6), "ragged mismatch"

    print("KERNEL_OK")
</pallas_src>

<mosaic_0001>
module attributes {stable_mosaic.version = 11 : i64} {
  func.func @_linear1d_kernel(%arg0: i32, %arg1: i32, %arg2: memref<8x256xf32, #tpu.memory_space<vmem>>, %arg3: memref<8x1xf32, #tpu.memory_space<vmem>>, %arg4: memref<8x1xf32, #tpu.memory_space<vmem>>, %arg5: memref<8x256xf32, #tpu.memory_space<vmem>>) attributes {dimension_semantics = [#tpu.dimension_semantics<parallel>, #tpu.dimension_semantics<parallel>], iteration_bounds = array<i64: 1, 1>, scalar_prefetch = 0 : i64, scratch_operands = 0 : i64, tpu.core_type = #tpu.core_type<tc>, window_params = [{transform_indices = @transform_0, window_bounds = array<i64: 8, 256>}, {transform_indices = @transform_1, window_bounds = array<i64: 8, 1>}, {transform_indices = @transform_2, window_bounds = array<i64: 8, 1>}, {transform_indices = @transform_3, window_bounds = array<i64: 8, 256>}]} {
    %c0 = arith.constant 0 : index
    %c0_0 = arith.constant 0 : index
    %0 = vector.load %arg2[%c0, %c0_0] : memref<8x256xf32, #tpu.memory_space<vmem>>, vector<8x256xf32>
    %c0_1 = arith.constant 0 : index
    %c0_2 = arith.constant 0 : index
    %1 = vector.load %arg3[%c0_1, %c0_2] : memref<8x1xf32, #tpu.memory_space<vmem>>, vector<8x1xf32>
    %2 = vector.broadcast %1 : vector<8x1xf32> to vector<8x256xf32>
    %3 = arith.mulf %0, %2 : vector<8x256xf32>
    %c0_3 = arith.constant 0 : index
    %c0_4 = arith.constant 0 : index
    %4 = vector.load %arg4[%c0_3, %c0_4] : memref<8x1xf32, #tpu.memory_space<vmem>>, vector<8x1xf32>
    %5 = vector.broadcast %4 : vector<8x1xf32> to vector<8x256xf32>
    %6 = arith.addf %3, %5 : vector<8x256xf32>
    %c0_5 = arith.constant 0 : index
    %c0_6 = arith.constant 0 : index
    %7 = vector.load %arg5[%c0_5, %c0_6] : memref<8x256xf32, #tpu.memory_space<vmem>>, vector<8x256xf32>
    tpu.vector_store %arg5[%c0_5, %c0_6], %6 {strides = array<i32>} : memref<8x256xf32, #tpu.memory_space<vmem>>, vector<8x256xf32>,
    return
  }
  func.func @transform_0(%arg0: i32, %arg1: i32) -> (i32, i32) {
    %c0_i32 = arith.constant 0 : i32
    return %arg0, %arg1 : i32, i32
  }
  func.func @transform_1(%arg0: i32, %arg1: i32) -> (i32, i32) {
    %c0_i32 = arith.constant 0 : i32
    %c0_i32_0 = arith.constant 0 : i32
    return %arg0, %c0_i32 : i32, i32
  }
  func.func @transform_2(%arg0: i32, %arg1: i32) -> (i32, i32) {
    %c0_i32 = arith.constant 0 : i32
    %c0_i32_0 = arith.constant 0 : i32
    return %arg0, %c0_i32 : i32, i32
  }
  func.func @transform_3(%arg0: i32, %arg1: i32) -> (i32, i32) {
    %c0_i32 = arith.constant 0 : i32
    return %arg0, %arg1 : i32, i32
  }
}

</mosaic_0001>

<llo_original>
// kernel: tpu_custom_call.1
$region0: #{tpu_custom_call.1}
  #allocation0 [shape = 'u32[]', space=smem, size = 0x4, offset = 0x4, fixed_abs, tag = 'smem constant byte address 0x4 - core index']
  #allocation1 [shape = 'u32[144,128]{1,0:T(1,128)}', space=vmem, size = 0x12000, scoped, tag = 'internal scratch']
  %s0 = inlined_call_operand.vmem [shape: f32[8,256], index: 0, kind: input, shape index: {}]
  %s1 = inlined_call_operand.vmem [shape: f32[8,1], index: 1, kind: input, shape index: {}]
  %s2 = inlined_call_operand.vmem [shape: f32[8,1], index: 2, kind: input, shape index: {}]
  %s3 = inlined_call_operand.hbm [shape: f32[8,256], index: 3, kind: output, shape index: {}]
  %s4 = sld [smem:[#allocation0]]
  $region22: #{tpu_custom_call.1} parent=0
    _
  %s6 = ssub.s32 1, %s4
  %s7 = scalar_select 0, %s6, %s4
  $region1: #{tpu_custom_call.1} parent=0
    #allocation2 [shape = 'u8[8192]{0}', space=vmem, size = 0x2000, scoped, tag = 'output window, operand 0, single buffered']
    #allocation3 [shape = 's32[1]{0}', space=sflag, size = 0x4, scoped, tag = 'scoped memory for tpu_custom_call.1']
    %8 = vsyncpa [#allocation3], 0
    // Predicated region
    $region2: #{tpu_custom_call.1} parent=1 // pred_check
      _
    $region3: #{tpu_custom_call.1} parent=1 // pred_check_branch
      %10 = sbr.rel (0) target = $region5
    $region4: #{tpu_custom_call.1} parent=1 // pred_region
      _
    $region5: #{tpu_custom_call.1} parent=1 // pred_fallthru
      _
    // Predicated region
    $region6: #{tpu_custom_call.1} parent=1 // pred_check
      _
    $region7: #{tpu_custom_call.1} parent=1 // pred_check_branch
      %12 = sbr.rel (0) target = $region9
    $region8: #{tpu_custom_call.1} parent=1 // pred_region
      _
    $region9: #{tpu_custom_call.1} parent=1 // pred_fallthru
      _
    // Predicated region
    $region10: #{tpu_custom_call.1} parent=1 // pred_check
      _
    $region11: #{tpu_custom_call.1} parent=1 // pred_check_branch
      %14 = sbr.rel (0) target = $region13
    $region12: #{tpu_custom_call.1} parent=1 // pred_region
      _
    $region13: #{tpu_custom_call.1} parent=1 // pred_fallthru
      _
    %v15 = vld [vmem:[%s0] sm:$0xff]
    %v16 = vld [vmem:[%s0 + $0x8] sm:$0xff]
    %v17 = vld [vmem:[%s1] sm:$0xff]
    %19 = vset.pattern.permute.xlu0 0
    %20 = vperm.xlu0 %19, %v17
    %v21 = vpop.permute.xlu0 %20
    %v23 = vmul.f32 %v15, %v21
    %v24 = vmul.f32 %v16, %v21
    %v25 = vld [vmem:[%s2] sm:$0xff]
    %27 = vset.pattern.permute.xlu0 0
    %28 = vperm.xlu0 %27, %v25
    %v29 = vpop.permute.xlu0 %28
    %v31 = vadd.f32 %v23, %v29
    %v32 = vadd.f32 %v24, %v29
    %33 = vst [vmem:[#allocation2] sm:$0xff] %v31
    %34 = vst [vmem:[#allocation2 + $0x8] sm:$0xff] %v32
    // Predicated region
    $region14: #{tpu_custom_call.1} parent=1 // pred_check
      _
    $region15: #{tpu_custom_call.1} parent=1 // pred_check_branch
      %36 = sbr.rel (0) target = $region17
    $region16: #{tpu_custom_call.1} parent=1 // pred_region
      %s38 = ssub.s32 256, 256
      %39 = vsyncadd [#allocation3], %s38
      %s41 = sshll.u32 [#allocation2], 4
      %s42 = int_to_ptr.vmem [resolvable:$true] %s41
      %44 = dma.vmem_to_hbm [thread:$0]  %s42, 256, %s3, [#allocation3]
    $region17: #{tpu_custom_call.1} parent=1 // pred_fallthru
      _
    // Predicated region
    $region18: #{tpu_custom_call.1} parent=1 // pred_check
      _
    $region19: #{tpu_custom_call.1} parent=1 // pred_check_branch
      %46 = sbr.rel (0) target = $region21
    $region20: #{tpu_custom_call.1} parent=1 // pred_region
      %47 = dma.done [#allocation3], 256
    $region21: #{tpu_custom_call.1} parent=1 // pred_fallthru
      _
    %48 = vsyncpa [#allocation3], 1

</llo_original>
